<compile_context>
chip_gen: v7x
topology: tpu7x:2x2x1
jax: 0.10.0
libtpu: 0.0.40
codegen_flags: <defaults>
</compile_context>

<pallas_src>
import functools

import jax
import jax.numpy as jnp
from jax import lax
from jax.experimental import pallas as pl
from jax.experimental.pallas import tpu as pltpu


def _split_hi_lo(x32):
    """bf16 hi/lo decomposition of an f32 array: x ~= hi + lo (both bf16)."""
    hi = x32.astype(jnp.bfloat16)
    lo = (x32 - hi.astype(jnp.float32)).astype(jnp.bfloat16)
    return hi, lo


def _fnet_fourier_kernel(x_ref, ch_ref, cs_ref, ss_ref, g_ref, b_ref, o_ref,
                         *, eps, hi_lo):
    """One full (S, H) slab (one batch element) per grid step."""
    H = x_ref.shape[2]
    f32 = jnp.float32

    if hi_lo:
        # f32-accurate path: hi/lo bf16 split of both operands, 3 MXU passes
        # per DFT (only the O(2^-18) lo*lo term is dropped).
        x32 = x_ref[0].astype(f32)                                  # (S, H)
        x_hi, x_lo = _split_hi_lo(x32)
        ch_hi, ch_lo = ch_ref[0], ch_ref[1]                         # (H, 2H) bf16
        # Hidden-dim DFT: fused (S, 2H) = X @ [cos_h | sin_h].
        xcxs = jnp.dot(x_hi, ch_hi, preferred_element_type=f32)
        xcxs += jnp.dot(x_hi, ch_lo, preferred_element_type=f32)
        xcxs += jnp.dot(x_lo, ch_hi, preferred_element_type=f32)
        xc_hi, xc_lo = _split_hi_lo(xcxs[:, :H])
        xs_hi, xs_lo = _split_hi_lo(xcxs[:, H:])
        cs_hi, cs_lo = cs_ref[0], cs_ref[1]                         # (S, S) bf16
        ss_hi, ss_lo = ss_ref[0], ss_ref[1]
        # Seq-dim DFT accumulated into one f32 value: C_S @ xc - S_S @ xs.
        fft_real = jnp.dot(cs_hi, xc_hi, preferred_element_type=f32)
        fft_real += jnp.dot(cs_hi, xc_lo, preferred_element_type=f32)
        fft_real += jnp.dot(cs_lo, xc_hi, preferred_element_type=f32)
        fft_real -= jnp.dot(ss_hi, xs_hi, preferred_element_type=f32)
        fft_real -= jnp.dot(ss_hi, xs_lo, preferred_element_type=f32)
        fft_real -= jnp.dot(ss_lo, xs_hi, preferred_element_type=f32)
        resid = x32
    else:
        # Fast bf16 path: one MXU pass per DFT, no full-slab f32 up-cast.
        x_bf = x_ref[0].astype(jnp.bfloat16)                        # (S, H)
        xcxs = jnp.dot(x_bf, ch_ref[0], preferred_element_type=f32)  # (S, 2H)
        fft_real = jnp.dot(cs_ref[0], xcxs[:, :H].astype(jnp.bfloat16),
                           preferred_element_type=f32)
        fft_real -= jnp.dot(ss_ref[0], xcxs[:, H:].astype(jnp.bfloat16),
                            preferred_element_type=f32)
        resid = x_ref[0].astype(f32)

    # Residual add + LayerNorm over the hidden dim (f32 statistics).
    z = resid + fft_real
    mean = jnp.mean(z, axis=-1, keepdims=True)
    cent = z - mean
    var = jnp.mean(cent * cent, axis=-1, keepdims=True)
    y = (cent * lax.rsqrt(var + eps) * g_ref[...].astype(f32)
         + b_ref[...].astype(f32))
    o_ref[0] = y.astype(o_ref.dtype)


def _dft_cos_sin(n):
    """cos/sin parts of the unnormalized DFT matrix exp(-2*pi*i*j*k/n), f32."""
    k = jnp.arange(n, dtype=jnp.int32)
    idx = (jnp.outer(k, k) % n).astype(jnp.float32)   # keep angle in [0, 2*pi)
    ang = (2.0 * jnp.pi / n) * idx
    return jnp.cos(ang), jnp.sin(ang)


def _vmem_limit_bytes():
    # Chip-aware scoped-VMEM limit: large enough to hold the working set
    # (v5e's 16 MiB default is not), with headroom below physical capacity
    # (64 MiB per TensorCore on v7x).
    try:
        cap = int(pltpu.get_tpu_info().vmem_capacity_bytes)
    except Exception:
        cap = 64 * 1024 * 1024
    return int(min(cap - cap // 8, 96 * 1024 * 1024))


def fnet_fourier_transform(hidden_states, gamma, beta, *, eps=1e-12,
                           precision=None):
    """[B, S, H] -> LayerNorm(hidden_states + Re(FFT2D(hidden_states))).

    precision: "bf16" (single bf16 MXU pass per DFT; default for bf16 inputs)
               or "f32" (hi/lo bf16 split, f32-grade accuracy; default else).
    """
    B, S, H = hidden_states.shape
    if precision is None:
        precision = "bf16" if hidden_states.dtype == jnp.bfloat16 else "f32"
    hi_lo = precision != "bf16"

    cos_s, sin_s = _dft_cos_sin(S)
    cos_h, sin_h = _dft_cos_sin(H)
    ch = jnp.concatenate([cos_h, sin_h], axis=1)                 # (H, 2H)

    if hi_lo:
        ch_c = jnp.stack(_split_hi_lo(ch), axis=0)               # (2, H, 2H) bf16
        cs_c = jnp.stack(_split_hi_lo(cos_s), axis=0)            # (2, S, S)
        ss_c = jnp.stack(_split_hi_lo(sin_s), axis=0)
    else:
        ch_c = ch.astype(jnp.bfloat16)[None]                     # (1, H, 2H)
        cs_c = cos_s.astype(jnp.bfloat16)[None]
        ss_c = sin_s.astype(jnp.bfloat16)[None]
    P = ch_c.shape[0]

    g2 = gamma.reshape(1, H)
    b2 = beta.reshape(1, H)

    kernel = functools.partial(_fnet_fourier_kernel, eps=eps, hi_lo=hi_lo)

    # Constants never change across grid steps -> single-buffer them
    # (default pipelining would allocate 2 VMEM buffers each).
    single = pl.Buffered(1)
    in_specs = [
        pl.BlockSpec((1, S, H), lambda b: (b, 0, 0)),            # activation slab
        pl.BlockSpec((P, H, 2 * H), lambda b: (0, 0, 0), pipeline_mode=single),
        pl.BlockSpec((P, S, S), lambda b: (0, 0, 0), pipeline_mode=single),
        pl.BlockSpec((P, S, S), lambda b: (0, 0, 0), pipeline_mode=single),
        pl.BlockSpec((1, H), lambda b: (0, 0), pipeline_mode=single),
        pl.BlockSpec((1, H), lambda b: (0, 0), pipeline_mode=single),
    ]

    itemsize = jnp.dtype(hidden_states.dtype).itemsize
    const_bytes = sum(int(c.size) * jnp.dtype(c.dtype).itemsize
                      for c in (ch_c, cs_c, ss_c, g2, b2))
    passes = 3 if hi_lo else 1
    matmul_flops = passes * B * (4 * S * H * H + 4 * S * S * H)
    cost = pl.CostEstimate(
        flops=matmul_flops + 10 * B * S * H,
        transcendentals=B * S,
        bytes_accessed=2 * B * S * H * itemsize + const_bytes,
    )

    out = pl.pallas_call(
        kernel,
        out_shape=jax.ShapeDtypeStruct((B, S, H), hidden_states.dtype),
        grid=(B,),
        in_specs=in_specs,
        out_specs=pl.BlockSpec((1, S, H), lambda b: (b, 0, 0)),
        compiler_params=pltpu.CompilerParams(
            dimension_semantics=("parallel",),     # batch over megacore / TCs
            vmem_limit_bytes=_vmem_limit_bytes()),
        cost_estimate=cost,
    )(hidden_states, ch_c, cs_c, ss_c, g2, b2)
    return out


def _reference(hidden_states, gamma, beta, eps=1e-12):
    fft_real = jnp.fft.fftn(hidden_states.astype(jnp.complex64), axes=(1, 2)).real
    z = hidden_states + fft_real
    mean = jnp.mean(z, axis=-1, keepdims=True)
    var = jnp.mean((z - mean) ** 2, axis=-1, keepdims=True)
    return (z - mean) / jnp.sqrt(var + eps) * gamma + beta


if __name__ == "__main__":
    # config: hidden_size=32, layer_norm_eps=1e-12; batch=2, seq=8
    B, S, H = 2, 8, 32
    eps = 1e-12

    key = jax.random.PRNGKey(0)
    k1, k2, k3 = jax.random.split(key, 3)

    hidden_states = jax.random.normal(k1, (B, S, H), dtype=jnp.float32)
    gamma = 1.0 + 0.1 * jax.random.normal(k2, (H,), dtype=jnp.float32)
    beta = 0.1 * jax.random.normal(k3, (H,), dtype=jnp.float32)

    ref = _reference(hidden_states, gamma, beta, eps=eps)

    # Accurate path (default for f32 inputs): hi/lo bf16 split on the MXU.
    out = jax.block_until_ready(
        fnet_fourier_transform(hidden_states, gamma, beta, eps=eps))
    assert out.shape == (B, S, H)
    assert jnp.allclose(out, ref, atol=2e-4, rtol=2e-4), "f32-path mismatch"

    # Fast single-pass bf16 path (what a bf16 FNet forward would use).
    out_bf = jax.block_until_ready(
        fnet_fourier_transform(hidden_states, gamma, beta, eps=eps,
                               precision="bf16"))
    assert jnp.allclose(out_bf, ref, atol=5e-2, rtol=5e-2), "bf16-path mismatch"

    print("KERNEL_OK")
</pallas_src>

<mosaic_0001>
module attributes {stable_mosaic.version = 11 : i64} {
  func.func @_fnet_fourier_kernel(%arg0: i32, %arg1: memref<1x8x32xf32, #tpu.memory_space<vmem>>, %arg2: memref<2x32x64xbf16, #tpu.memory_space<vmem>>, %arg3: memref<2x8x8xbf16, #tpu.memory_space<vmem>>, %arg4: memref<2x8x8xbf16, #tpu.memory_space<vmem>>, %arg5: memref<1x32xf32, #tpu.memory_space<vmem>>, %arg6: memref<1x32xf32, #tpu.memory_space<vmem>>, %arg7: memref<1x8x32xf32, #tpu.memory_space<vmem>>) attributes {dimension_semantics = [#tpu.dimension_semantics<parallel>], iteration_bounds = array<i64: 2>, scalar_prefetch = 0 : i64, scratch_operands = 0 : i64, tpu.core_type = #tpu.core_type<tc>, window_params = [{transform_indices = @transform_0, window_bounds = array<i64: 1, 8, 32>}, {pipeline_mode = #tpu.pipeline_mode<synchronous>, transform_indices = @transform_1, window_bounds = array<i64: 2, 32, 64>}, {pipeline_mode = #tpu.pipeline_mode<synchronous>, transform_indices = @transform_2, window_bounds = array<i64: 2, 8, 8>}, {pipeline_mode = #tpu.pipeline_mode<synchronous>, transform_indices = @transform_3, window_bounds = array<i64: 2, 8, 8>}, {pipeline_mode = #tpu.pipeline_mode<synchronous>, transform_indices = @transform_4, window_bounds = array<i64: 1, 32>}, {pipeline_mode = #tpu.pipeline_mode<synchronous>, transform_indices = @transform_5, window_bounds = array<i64: 1, 32>}, {transform_indices = @transform_6, window_bounds = array<i64: 1, 8, 32>}]} {
    %c0 = arith.constant 0 : index
    %c0_0 = arith.constant 0 : index
    %c0_1 = arith.constant 0 : index
    %0 = vector.load %arg1[%c0, %c0_0, %c0_1] : memref<1x8x32xf32, #tpu.memory_space<vmem>>, vector<1x8x32xf32>
    %1 = vector.shape_cast %0 : vector<1x8x32xf32> to vector<8x32xf32>
    %2 = arith.truncf %1 : vector<8x32xf32> to vector<8x32xbf16>
    %3 = arith.extf %2 : vector<8x32xbf16> to vector<8x32xf32>
    %4 = arith.subf %1, %3 : vector<8x32xf32>
    %5 = arith.truncf %4 : vector<8x32xf32> to vector<8x32xbf16>
    %c0_2 = arith.constant 0 : index
    %c0_3 = arith.constant 0 : index
    %c0_4 = arith.constant 0 : index
    %6 = vector.load %arg2[%c0_2, %c0_3, %c0_4] : memref<2x32x64xbf16, #tpu.memory_space<vmem>>, vector<1x32x64xbf16>
    %7 = vector.shape_cast %6 : vector<1x32x64xbf16> to vector<32x64xbf16>
    %c1 = arith.constant 1 : index
    %c0_5 = arith.constant 0 : index
    %c0_6 = arith.constant 0 : index
    %8 = vector.load %arg2[%c1, %c0_5, %c0_6] : memref<2x32x64xbf16, #tpu.memory_space<vmem>>, vector<1x32x64xbf16>
    %9 = vector.shape_cast %8 : vector<1x32x64xbf16> to vector<32x64xbf16>
    %cst = arith.constant dense<0.000000e+00> : vector<8x64xf32>
    %10 = tpu.matmul %2, %7, %cst {dimension_numbers = #tpu.dot_dimension_numbers<[1], [0], [0], [1], [0, 0, 1, 1], [], []>} : vector<8x32xbf16>, vector<32x64xbf16>, vector<8x64xf32> -> vector<8x64xf32>
    %cst_7 = arith.constant dense<0.000000e+00> : vector<8x64xf32>
    %11 = tpu.matmul %2, %9, %cst_7 {dimension_numbers = #tpu.dot_dimension_numbers<[1], [0], [0], [1], [0, 0, 1, 1], [], []>} : vector<8x32xbf16>, vector<32x64xbf16>, vector<8x64xf32> -> vector<8x64xf32>
    %12 = arith.addf %10, %11 : vector<8x64xf32>
    %cst_8 = arith.constant dense<0.000000e+00> : vector<8x64xf32>
    %13 = tpu.matmul %5, %7, %cst_8 {dimension_numbers = #tpu.dot_dimension_numbers<[1], [0], [0], [1], [0, 0, 1, 1], [], []>} : vector<8x32xbf16>, vector<32x64xbf16>, vector<8x64xf32> -> vector<8x64xf32>
    %14 = arith.addf %12, %13 : vector<8x64xf32>
    %15 = vector.extract_strided_slice %14 {offsets = [0, 0], sizes = [8, 32], strides = [1, 1]} : vector<8x64xf32> to vector<8x32xf32>
    %16 = arith.truncf %15 : vector<8x32xf32> to vector<8x32xbf16>
    %17 = arith.extf %16 : vector<8x32xbf16> to vector<8x32xf32>
    %18 = arith.subf %15, %17 : vector<8x32xf32>
    %19 = arith.truncf %18 : vector<8x32xf32> to vector<8x32xbf16>
    %20 = vector.extract_strided_slice %14 {offsets = [0, 32], sizes = [8, 32], strides = [1, 1]} : vector<8x64xf32> to vector<8x32xf32>
    %21 = arith.truncf %20 : vector<8x32xf32> to vector<8x32xbf16>
    %22 = arith.extf %21 : vector<8x32xbf16> to vector<8x32xf32>
    %23 = arith.subf %20, %22 : vector<8x32xf32>
    %24 = arith.truncf %23 : vector<8x32xf32> to vector<8x32xbf16>
    %c0_9 = arith.constant 0 : index
    %c0_10 = arith.constant 0 : index
    %c0_11 = arith.constant 0 : index
    %25 = vector.load %arg3[%c0_9, %c0_10, %c0_11] : memref<2x8x8xbf16, #tpu.memory_space<vmem>>, vector<1x8x8xbf16>
    %26 = vector.shape_cast %25 : vector<1x8x8xbf16> to vector<8x8xbf16>
    %c1_12 = arith.constant 1 : index
    %c0_13 = arith.constant 0 : index
    %c0_14 = arith.constant 0 : index
    %27 = vector.load %arg3[%c1_12, %c0_13, %c0_14] : memref<2x8x8xbf16, #tpu.memory_space<vmem>>, vector<1x8x8xbf16>
    %28 = vector.shape_cast %27 : vector<1x8x8xbf16> to vector<8x8xbf16>
    %c0_15 = arith.constant 0 : index
    %c0_16 = arith.constant 0 : index
    %c0_17 = arith.constant 0 : index
    %29 = vector.load %arg4[%c0_15, %c0_16, %c0_17] : memref<2x8x8xbf16, #tpu.memory_space<vmem>>, vector<1x8x8xbf16>
    %30 = vector.shape_cast %29 : vector<1x8x8xbf16> to vector<8x8xbf16>
    %c1_18 = arith.constant 1 : index
    %c0_19 = arith.constant 0 : index
    %c0_20 = arith.constant 0 : index
    %31 = vector.load %arg4[%c1_18, %c0_19, %c0_20] : memref<2x8x8xbf16, #tpu.memory_space<vmem>>, vector<1x8x8xbf16>
    %32 = vector.shape_cast %31 : vector<1x8x8xbf16> to vector<8x8xbf16>
    %cst_21 = arith.constant dense<0.000000e+00> : vector<8x32xf32>
    %33 = tpu.matmul %26, %16, %cst_21 {dimension_numbers = #tpu.dot_dimension_numbers<[1], [0], [0], [1], [0, 0, 1, 1], [], []>} : vector<8x8xbf16>, vector<8x32xbf16>, vector<8x32xf32> -> vector<8x32xf32>
    %cst_22 = arith.constant dense<0.000000e+00> : vector<8x32xf32>
    %34 = tpu.matmul %26, %19, %cst_22 {dimension_numbers = #tpu.dot_dimension_numbers<[1], [0], [0], [1], [0, 0, 1, 1], [], []>} : vector<8x8xbf16>, vector<8x32xbf16>, vector<8x32xf32> -> vector<8x32xf32>
    %35 = arith.addf %33, %34 : vector<8x32xf32>
    %cst_23 = arith.constant dense<0.000000e+00> : vector<8x32xf32>
    %36 = tpu.matmul %28, %16, %cst_23 {dimension_numbers = #tpu.dot_dimension_numbers<[1], [0], [0], [1], [0, 0, 1, 1], [], []>} : vector<8x8xbf16>, vector<8x32xbf16>, vector<8x32xf32> -> vector<8x32xf32>
    %37 = arith.addf %35, %36 : vector<8x32xf32>
    %cst_24 = arith.constant dense<0.000000e+00> : vector<8x32xf32>
    %38 = tpu.matmul %30, %21, %cst_24 {dimension_numbers = #tpu.dot_dimension_numbers<[1], [0], [0], [1], [0, 0, 1, 1], [], []>} : vector<8x8xbf16>, vector<8x32xbf16>, vector<8x32xf32> -> vector<8x32xf32>
    %39 = arith.subf %37, %38 : vector<8x32xf32>
    %cst_25 = arith.constant dense<0.000000e+00> : vector<8x32xf32>
    %40 = tpu.matmul %30, %24, %cst_25 {dimension_numbers = #tpu.dot_dimension_numbers<[1], [0], [0], [1], [0, 0, 1, 1], [], []>} : vector<8x8xbf16>, vector<8x32xbf16>, vector<8x32xf32> -> vector<8x32xf32>
    %41 = arith.subf %39, %40 : vector<8x32xf32>
    %cst_26 = arith.constant dense<0.000000e+00> : vector<8x32xf32>
    %42 = tpu.matmul %32, %21, %cst_26 {dimension_numbers = #tpu.dot_dimension_numbers<[1], [0], [0], [1], [0, 0, 1, 1], [], []>} : vector<8x8xbf16>, vector<8x32xbf16>, vector<8x32xf32> -> vector<8x32xf32>
    %43 = arith.subf %41, %42 : vector<8x32xf32>
    %44 = arith.addf %1, %43 : vector<8x32xf32>
    %cst_27 = arith.constant dense<0.000000e+00> : vector<8xf32>
    %45 = vector.multi_reduction <add>, %44, %cst_27 [1] : vector<8x32xf32> to vector<8xf32>
    %46 = vector.shape_cast %45 : vector<8xf32> to vector<8x1xf32>
    %cst_28 = arith.constant 3.200000e+01 : f32
    %47 = vector.broadcast %cst_28 : f32 to vector<8x1xf32>
    %48 = arith.divf %46, %47 : vector<8x1xf32>
    %49 = vector.broadcast %48 : vector<8x1xf32> to vector<8x32xf32>
    %50 = arith.subf %44, %49 : vector<8x32xf32>
    %51 = arith.mulf %50, %50 : vector<8x32xf32>
    %cst_29 = arith.constant dense<0.000000e+00> : vector<8xf32>
    %52 = vector.multi_reduction <add>, %51, %cst_29 [1] : vector<8x32xf32> to vector<8xf32>
    %53 = vector.shape_cast %52 : vector<8xf32> to vector<8x1xf32>
    %cst_30 = arith.constant 3.200000e+01 : f32
    %54 = vector.broadcast %cst_30 : f32 to vector<8x1xf32>
    %55 = arith.divf %53, %54 : vector<8x1xf32>
    %cst_31 = arith.constant 9.99999996E-13 : f32
    %56 = vector.broadcast %cst_31 : f32 to vector<8x1xf32>
    %57 = arith.addf %55, %56 : vector<8x1xf32>
    %58 = math.rsqrt %57 : vector<8x1xf32>
    %59 = vector.broadcast %58 : vector<8x1xf32> to vector<8x32xf32>
    %60 = arith.mulf %50, %59 : vector<8x32xf32>
    %c0_32 = arith.constant 0 : index
    %c0_33 = arith.constant 0 : index
    %61 = vector.load %arg5[%c0_32, %c0_33] : memref<1x32xf32, #tpu.memory_space<vmem>>, vector<1x32xf32>
    %62 = vector.broadcast %61 : vector<1x32xf32> to vector<8x32xf32>
    %63 = arith.mulf %60, %62 : vector<8x32xf32>
    %c0_34 = arith.constant 0 : index
    %c0_35 = arith.constant 0 : index
    %64 = vector.load %arg6[%c0_34, %c0_35] : memref<1x32xf32, #tpu.memory_space<vmem>>, vector<1x32xf32>
    %65 = vector.broadcast %64 : vector<1x32xf32> to vector<8x32xf32>
    %66 = arith.addf %63, %65 : vector<8x32xf32>
    %c0_36 = arith.constant 0 : index
    %c0_37 = arith.constant 0 : index
    %c0_38 = arith.constant 0 : index
    %67 = vector.load %arg7[%c0_36, %c0_37, %c0_38] : memref<1x8x32xf32, #tpu.memory_space<vmem>>, vector<1x8x32xf32>
    %68 = vector.shape_cast %67 : vector<1x8x32xf32> to vector<8x32xf32>
    %69 = vector.shape_cast %66 : vector<8x32xf32> to vector<1x8x32xf32>
    tpu.vector_store %arg7[%c0_36, %c0_37, %c0_38], %69 {strides = array<i32>} : memref<1x8x32xf32, #tpu.memory_space<vmem>>, vector<1x8x32xf32>,
    return
  }
  func.func @transform_0(%arg0: i32) -> (i32, i32, i32) {
    %c0_i32 = arith.constant 0 : i32
    %c0_i32_0 = arith.constant 0 : i32
    %c0_i32_1 = arith.constant 0 : i32
    return %arg0, %c0_i32, %c0_i32_0 : i32, i32, i32
  }
  func.func @transform_1(%arg0: i32) -> (i32, i32, i32) {
    %c0_i32 = arith.constant 0 : i32
    %c0_i32_0 = arith.constant 0 : i32
    %c0_i32_1 = arith.constant 0 : i32
    %c0_i32_2 = arith.constant 0 : i32
    return %c0_i32, %c0_i32_0, %c0_i32_1 : i32, i32, i32
  }
  func.func @transform_2(%arg0: i32) -> (i32, i32, i32) {
    %c0_i32 = arith.constant 0 : i32
    %c0_i32_0 = arith.constant 0 : i32
    %c0_i32_1 = arith.constant 0 : i32
    %c0_i32_2 = arith.constant 0 : i32
    return %c0_i32, %c0_i32_0, %c0_i32_1 : i32, i32, i32
  }
  func.func @transform_3(%arg0: i32) -> (i32, i32, i32) {
    %c0_i32 = arith.constant 0 : i32
    %c0_i32_0 = arith.constant 0 : i32
    %c0_i32_1 = arith.constant 0 : i32
    %c0_i32_2 = arith.constant 0 : i32
    return %c0_i32, %c0_i32_0, %c0_i32_1 : i32, i32, i32
  }
  func.func @transform_4(%arg0: i32) -> (i32, i32) {
    %c0_i32 = arith.constant 0 : i32
    %c0_i32_0 = arith.constant 0 : i32
    %c0_i32_1 = arith.constant 0 : i32
    return %c0_i32, %c0_i32_0 : i32, i32
  }
  func.func @transform_5(%arg0: i32) -> (i32, i32) {
    %c0_i32 = arith.constant 0 : i32
    %c0_i32_0 = arith.constant 0 : i32
    %c0_i32_1 = arith.constant 0 : i32
    return %c0_i32, %c0_i32_0 : i32, i32
  }
  func.func @transform_6(%arg0: i32) -> (i32, i32, i32) {
    %c0_i32 = arith.constant 0 : i32
    %c0_i32_0 = arith.constant 0 : i32
    %c0_i32_1 = arith.constant 0 : i32
    return %arg0, %c0_i32, %c0_i32_0 : i32, i32, i32
  }
}

</mosaic_0001>

<llo_original>
// kernel: tpu_custom_call.1
$region0: #{tpu_custom_call.1}
  #allocation0 [shape = 'u32[]', space=smem, size = 0x4, offset = 0x4, fixed_abs, tag = 'smem constant byte address 0x4 - core index']
  #allocation1 [shape = 'u32[144,128]{1,0:T(1,128)}', space=vmem, size = 0x12000, scoped, tag = 'internal scratch']
  %s0 = inlined_call_operand.hbm [shape: f32[2,8,32], index: 0, kind: input, shape index: {}]
  %s1 = inlined_call_operand.hbm [shape: bf16[2,32,64], index: 1, kind: input, shape index: {}]
  %s2 = inlined_call_operand.hbm [shape: bf16[2,8,8], index: 2, kind: input, shape index: {}]
  %s3 = inlined_call_operand.vmem [shape: bf16[2,8,8], index: 3, kind: input, shape index: {}]
  %s4 = inlined_call_operand.vmem [shape: f32[1,32], index: 4, kind: input, shape index: {}]
  %s5 = inlined_call_operand.vmem [shape: f32[1,32], index: 5, kind: input, shape index: {}]
  %s6 = inlined_call_operand.hbm [shape: f32[2,8,32], index: 6, kind: output, shape index: {}]
  %s7 = sld [smem:[#allocation0]]
  $region69: #{tpu_custom_call.1} parent=0
    _
  %s9 = ssub.s32 1, %s7
  %s10 = scalar_select 0, %s9, %s7
  $region1: #{tpu_custom_call.1} parent=0
    #allocation2 [shape = 'u8[8192]{0}', space=vmem, size = 0x2000, scoped, tag = 'input window, operand 0']
    #allocation3 [shape = 's32[2]{0}', space=sflag, size = 0x8, scoped, tag = 'scoped memory for tpu_custom_call.1']
    #allocation4 [shape = 's32[2]{0}', space=sflag, size = 0x8, scoped, tag = 'scoped memory for tpu_custom_call.1']
    #allocation5 [shape = 'u8[16384]{0}', space=vmem, size = 0x4000, scoped, tag = 'input window, operand 1, single buffered']
    #allocation6 [shape = 's32[1]{0}', space=sflag, size = 0x4, scoped, tag = 'scoped memory for tpu_custom_call.1']
    #allocation7 [shape = 'u8[4096]{0}', space=vmem, size = 0x1000, scoped, tag = 'input window, operand 2, single buffered']
    #allocation8 [shape = 'u8[8192]{0}', space=vmem, size = 0x2000, scoped, tag = 'output window, operand 0']
    %11 = vsyncpa [#allocation3], 0
    %s12 = scalar_lea.sflag [#allocation3], 1
    %13 = vsyncpa %s12, 0
    %14 = vsyncpa [#allocation6], 0
    %15 = vsyncpa [#allocation4], 0
    %s16 = scalar_lea.sflag [#allocation4], 1
    %17 = vsyncpa %s16, 0
    loop: start=0, step=1, limit=4
    $region2: #{tpu_custom_call.1} parent=1 // loop_pre_header
      _
    $region3: #{tpu_custom_call.1} parent=1 // loop_header
      %s19 = sphi 0, %s23
      %p20 = scmp.ge.s32.totalorder %s19, 4
      %s29 = sphi 0, %s31
      %s32 = sphi 0, %s29
      %s33 = sphi 0, %s32
      %s49 = sphi 0, %s33
      %s53 = sphi 0, %s53
      %s55 = sphi 0, %s53
      %s56 = sphi 0, %s55
      %s70 = sphi 0, %s56
      %s74 = sphi 0, %s74
      %s76 = sphi 0, %s74
      %s77 = sphi 0, %s76
      %s91 = sphi 0, %s77
      %s95 = sphi 0, %s95
      %s97 = sphi 0, %s95
      %s98 = sphi 0, %s97
      %s112 = sphi 0, %s98
      %s116 = sphi 0, %s116
      %s118 = sphi 0, %s116
      %s119 = sphi 0, %s118
      %s133 = sphi 0, %s119
      %s137 = sphi 0, %s137
      %s139 = sphi 0, %s137
      %s140 = sphi 0, %s139
      %s154 = sphi 0, %s140
      %s160 = sphi 0, %s162
      %s163 = sphi 0, %s160
      %s164 = sphi 0, %s163
      %s180 = sphi 0, %s164
    $region4: #{tpu_custom_call.1} parent=1 // loop_header_branch
      %22 = sbr.rel (%p20) target = $region8
    $region5: #{tpu_custom_call.1} parent=1 // loop_body
      %s24 = ssub.s32 %s19, 1
      %s25 = ssub.s32 %s19, 2
      %s26 = sadd.s32 %s19, 1
      %s27 = ssub.s32 %s19, %s26
      %p28 = scmp.eq.s32.totalorder %s27, 0
      %s30 = sadd.s32 %s29, 1
      %s31 = scalar_select %p28, %s29, %s30
      %p34 = pneg %p28
      %p35 = scmp.eq.s32.totalorder %s19, 1
      %p36 = por %p34, %p35
      %p37 = scmp.ne.s32.totalorder %s29, %s32
      %p38 = scmp.eq.s32.totalorder %s19, 0
      %p39 = por %p37, %p38
      %p40 = scmp.ne.s32.totalorder %s29, %s32
      %p41 = scmp.eq.s32.totalorder %s24, 1
      %p42 = por %p40, %p41
      %p43 = scmp.ne.s32.totalorder %s32, %s33
      %p44 = scmp.eq.s32.totalorder %s24, 0
      %p45 = por %p43, %p44
      %p46 = scmp.ne.s32.totalorder %s32, %s33
      %p47 = scmp.eq.s32.totalorder %s25, 1
      %p48 = por %p46, %p47
      %p50 = scmp.ne.s32.totalorder %s33, %s49
      %p51 = scmp.eq.s32.totalorder %s25, 0
      %p52 = por %p50, %p51
      %s54 = sadd.s32 %s53, 1
      %p57 = scmp.eq.s32.totalorder %s19, 1
      %p58 = scmp.ne.s32.totalorder %s53, %s55
      %p59 = scmp.eq.s32.totalorder %s19, 0
      %p60 = por %p58, %p59
      %p61 = scmp.ne.s32.totalorder %s53, %s55
      %p62 = scmp.eq.s32.totalorder %s24, 1
      %p63 = por %p61, %p62
      %p64 = scmp.ne.s32.totalorder %s55, %s56
      %p65 = scmp.eq.s32.totalorder %s24, 0
      %p66 = por %p64, %p65
      %p67 = scmp.ne.s32.totalorder %s55, %s56
      %p68 = scmp.eq.s32.totalorder %s25, 1
      %p69 = por %p67, %p68
      %p71 = scmp.ne.s32.totalorder %s56, %s70
      %p72 = scmp.eq.s32.totalorder %s25, 0
      %p73 = por %p71, %p72
      %s75 = sadd.s32 %s74, 1
      %p78 = scmp.eq.s32.totalorder %s19, 1
      %p79 = scmp.ne.s32.totalorder %s74, %s76
      %p80 = scmp.eq.s32.totalorder %s19, 0
      %p81 = por %p79, %p80
      %p82 = scmp.ne.s32.totalorder %s74, %s76
      %p83 = scmp.eq.s32.totalorder %s24, 1
      %p84 = por %p82, %p83
      %p85 = scmp.ne.s32.totalorder %s76, %s77
      %p86 = scmp.eq.s32.totalorder %s24, 0
      %p87 = por %p85, %p86
      %p88 = scmp.ne.s32.totalorder %s76, %s77
      %p89 = scmp.eq.s32.totalorder %s25, 1
      %p90 = por %p88, %p89
      %p92 = scmp.ne.s32.totalorder %s77, %s91
      %p93 = scmp.eq.s32.totalorder %s25, 0
      %p94 = por %p92, %p93
      %s96 = sadd.s32 %s95, 1
      %p99 = scmp.eq.s32.totalorder %s19, 1
      %p100 = scmp.ne.s32.totalorder %s95, %s97
      %p101 = scmp.eq.s32.totalorder %s19, 0
      %p102 = por %p100, %p101
      %p103 = scmp.ne.s32.totalorder %s95, %s97
      %p104 = scmp.eq.s32.totalorder %s24, 1
      %p105 = por %p103, %p104
      %p106 = scmp.ne.s32.totalorder %s97, %s98
      %p107 = scmp.eq.s32.totalorder %s24, 0
      %p108 = por %p106, %p107
      %p109 = scmp.ne.s32.totalorder %s97, %s98
      %p110 = scmp.eq.s32.totalorder %s25, 1
      %p111 = por %p109, %p110
      %p113 = scmp.ne.s32.totalorder %s98, %s112
      %p114 = scmp.eq.s32.totalorder %s25, 0
      %p115 = por %p113, %p114
      %s117 = sadd.s32 %s116, 1
      %p120 = scmp.eq.s32.totalorder %s19, 1
      %p121 = scmp.ne.s32.totalorder %s116, %s118
      %p122 = scmp.eq.s32.totalorder %s19, 0
      %p123 = por %p121, %p122
      %p124 = scmp.ne.s32.totalorder %s116, %s118
      %p125 = scmp.eq.s32.totalorder %s24, 1
      %p126 = por %p124, %p125
      %p127 = scmp.ne.s32.totalorder %s118, %s119
      %p128 = scmp.eq.s32.totalorder %s24, 0
      %p129 = por %p127, %p128
      %p130 = scmp.ne.s32.totalorder %s118, %s119
      %p131 = scmp.eq.s32.totalorder %s25, 1
      %p132 = por %p130, %p131
      %p134 = scmp.ne.s32.totalorder %s119, %s133
      %p135 = scmp.eq.s32.totalorder %s25, 0
      %p136 = por %p134, %p135
      %s138 = sadd.s32 %s137, 1
      %p141 = scmp.eq.s32.totalorder %s19, 1
      %p142 = scmp.ne.s32.totalorder %s137, %s139
      %p143 = scmp.eq.s32.totalorder %s19, 0
      %p144 = por %p142, %p143
      %p145 = scmp.ne.s32.totalorder %s137, %s139
      %p146 = scmp.eq.s32.totalorder %s24, 1
      %p147 = por %p145, %p146
      %p148 = scmp.ne.s32.totalorder %s139, %s140
      %p149 = scmp.eq.s32.totalorder %s24, 0
      %p150 = por %p148, %p149
      %p151 = scmp.ne.s32.totalorder %s139, %s140
      %p152 = scmp.eq.s32.totalorder %s25, 1
      %p153 = por %p151, %p152
      %p155 = scmp.ne.s32.totalorder %s140, %s154
      %p156 = scmp.eq.s32.totalorder %s25, 0
      %p157 = por %p155, %p156
      %s158 = ssub.s32 %s19, %s26
      %p159 = scmp.eq.s32.totalorder %s158, 0
      %s161 = sadd.s32 %s160, 1
      %s162 = scalar_select %p159, %s160, %s161
      %p165 = pneg %p159
      %p166 = scmp.eq.s32.totalorder %s19, 1
      %p167 = por %p165, %p166
      %p168 = scmp.ne.s32.totalorder %s160, %s163
      %p169 = scmp.eq.s32.totalorder %s19, 0
      %p170 = por %p168, %p169
      %p171 = scmp.ne.s32.totalorder %s160, %s163
      %p172 = scmp.eq.s32.totalorder %s24, 1
      %p173 = por %p171, %p172
      %p174 = scmp.ne.s32.totalorder %s163, %s164
      %p175 = scmp.eq.s32.totalorder %s24, 0
      %p176 = por %p174, %p175
      %p177 = scmp.ne.s32.totalorder %s163, %s164
      %p178 = scmp.eq.s32.totalorder %s25, 1
      %p179 = por %p177, %p178
      %p181 = scmp.ne.s32.totalorder %s164, %s180
      %p182 = scmp.eq.s32.totalorder %s25, 0
      %p183 = por %p181, %p182
      %p184 = scmp.le.s32.totalorder 1, %s19
      %p185 = scmp.lt.s32.totalorder %s19, 3
      %p186 = pnand %p184, %p185
      %p187 = pneg %p186
      // Predicated region
      $region9: #{tpu_custom_call.1} parent=5 // pred_check
        _
      $region10: #{tpu_custom_call.1} parent=5 // pred_check_branch
        %189 = sbr.rel (%p186) target = $region12
      $region11: #{tpu_custom_call.1} parent=5 // pred_region
        %s190 = ssub.s32 %s19, 1
        // Predicated region
        $region13: #{tpu_custom_call.1} parent=11 // pred_check
          %p191 = pneg %p66
        $region14: #{tpu_custom_call.1} parent=11 // pred_check_branch
          %193 = sbr.rel (%p191) target = $region16
        $region15: #{tpu_custom_call.1} parent=11 // pred_region
          %s195 = ssub.s32 512, 512
          %196 = vsyncadd [#allocation6], %s195
          %s197 = sshll.u32 [#allocation5], 4
          %s198 = int_to_ptr.vmem [resolvable:$true] %s197
          %203 = dma.hbm_to_vmem [thread:$0]  %s1, 512, %s198, [#allocation6], 64, 64, 4
        $region16: #{tpu_custom_call.1} parent=11 // pred_fallthru
          _
        // Predicated region
        $region17: #{tpu_custom_call.1} parent=11 // pred_check
          %p204 = pneg %p87
        $region18: #{tpu_custom_call.1} parent=11 // pred_check_branch
          %206 = sbr.rel (%p204) target = $region20
        $region19: #{tpu_custom_call.1} parent=11 // pred_region
          %s208 = ssub.s32 128, 128
          %209 = vsyncadd [#allocation6], %s208
          %s210 = sshll.u32 [#allocation7], 4
          %s211 = int_to_ptr.vmem [resolvable:$true] %s210
          %216 = dma.hbm_to_vmem [thread:$0]  %s2, 128, %s211, [#allocation6], 64, 64, 4
        $region20: #{tpu_custom_call.1} parent=11 // pred_fallthru
          _
        // Predicated region
        $region21: #{tpu_custom_call.1} parent=11 // pred_check
          %p217 = pneg %p108
        $region22: #{tpu_custom_call.1} parent=11 // pred_check_branch
          %219 = sbr.rel (%p217) target = $region24
        $region23: #{tpu_custom_call.1} parent=11 // pred_region
          _
        $region24: #{tpu_custom_call.1} parent=11 // pred_fallthru
          _
        // Predicated region
        $region25: #{tpu_custom_call.1} parent=11 // pred_check
          %p220 = pneg %p129
        $region26: #{tpu_custom_call.1} parent=11 // pred_check_branch
          %222 = sbr.rel (%p220) target = $region28
        $region27: #{tpu_custom_call.1} parent=11 // pred_region
          _
        $region28: #{tpu_custom_call.1} parent=11 // pred_fallthru
          _
        // Predicated region
        $region29: #{tpu_custom_call.1} parent=11 // pred_check
          %p223 = pneg %p150
        $region30: #{tpu_custom_call.1} parent=11 // pred_check_branch
          %225 = sbr.rel (%p223) target = $region32
        $region31: #{tpu_custom_call.1} parent=11 // pred_region
          _
        $region32: #{tpu_custom_call.1} parent=11 // pred_fallthru
          _
      $region12: #{tpu_custom_call.1} parent=5 // pred_fallthru
        _
      %p226 = scmp.lt.s32.totalorder %s19, 2
      // Predicated region
      $region33: #{tpu_custom_call.1} parent=5 // pred_check
        %p227 = pneg %p226
      $region34: #{tpu_custom_call.1} parent=5 // pred_check_branch
        %229 = sbr.rel (%p227) target = $region36
      $region35: #{tpu_custom_call.1} parent=5 // pred_region
        // Predicated region
        $region37: #{tpu_custom_call.1} parent=35 // pred_check
          %p230 = pneg %p39
        $region38: #{tpu_custom_call.1} parent=35 // pred_check_branch
          %232 = sbr.rel (%p230) target = $region40
        $region39: #{tpu_custom_call.1} parent=35 // pred_region
          %s233 = sand.u32 %s29, 1
          %s234 = scalar_lea.sflag [#allocation3], %s233
          %s235 = sand.u32 %s29, 1
          %s236 = smul.addr %s235, 8
          %s237 = scalar_lea.vmem [#allocation2], %s236
          %s239 = ssub.s32 128, 128
          %240 = vsyncadd %s234, %s239
          %s241 = smul.addr %s19, 128
          %s242 = scalar_lea.hbm %s0, %s241
          %s244 = sshll.u32 %s237, 4
          %s245 = int_to_ptr.vmem [resolvable:$true] %s244
          %247 = dma.hbm_to_vmem [thread:$0]  %s242, 128, %s245, %s234
        $region40: #{tpu_custom_call.1} parent=35 // pred_fallthru
          _
      $region36: #{tpu_custom_call.1} parent=5 // pred_fallthru
        _
      %p248 = scmp.le.s32.totalorder 1, %s19
      %p249 = scmp.lt.s32.totalorder %s19, 3
      %p250 = pnand %p248, %p249
      %p251 = pneg %p250
      // Predicated region
      $region41: #{tpu_custom_call.1} parent=5 // pred_check
        _
      $region42: #{tpu_custom_call.1} parent=5 // pred_check_branch
        %253 = sbr.rel (%p250) target = $region44
      $region43: #{tpu_custom_call.1} parent=5 // pred_region
        %s254 = ssub.s32 %s19, 1
        %s255 = sand.u32 %s32, 1
        %s256 = scalar_lea.sflag [#allocation3], %s255
        %s257 = sand.u32 %s32, 1
        %s258 = smul.addr %s257, 8
        %s259 = scalar_lea.vmem [#allocation2], %s258
        // Predicated region
        $region45: #{tpu_custom_call.1} parent=43 // pred_check
          %p260 = pneg %p45
        $region46: #{tpu_custom_call.1} parent=43 // pred_check_branch
          %262 = sbr.rel (%p260) target = $region48
        $region47: #{tpu_custom_call.1} parent=43 // pred_region
          %263 = dma.done %s256, 128
        $region48: #{tpu_custom_call.1} parent=43 // pred_fallthru
          _
        // Predicated region
        $region49: #{tpu_custom_call.1} parent=43 // pred_check
          %p264 = pneg %p66
        $region50: #{tpu_custom_call.1} parent=43 // pred_check_branch
          %266 = sbr.rel (%p264) target = $region52
        $region51: #{tpu_custom_call.1} parent=43 // pred_region
          %267 = dma.done [#allocation6], 512
        $region52: #{tpu_custom_call.1} parent=43 // pred_fallthru
          _
        // Predicated region
        $region53: #{tpu_custom_call.1} parent=43 // pred_check
          %p268 = pneg %p87
        $region54: #{tpu_custom_call.1} parent=43 // pred_check_branch
          %270 = sbr.rel (%p268) target = $region56
        $region55: #{tpu_custom_call.1} parent=43 // pred_region
          %271 = dma.done [#allocation6], 128
        $region56: #{tpu_custom_call.1} parent=43 // pred_fallthru
          _
        %s272 = sand.u32 %s32, 1
        %s273 = scalar_lea.sflag [#allocation3], %s272
        %s274 = sand.u32 %s32, 1
        %s275 = smul.addr %s274, 8
        %s276 = scalar_lea.vmem [#allocation2], %s275
        %p277 = pneg %p45
        %p278 = pneg %p42
        %p279 = pneg %p66
        %p280 = pneg %p63
        %p281 = pneg %p87
        %p282 = pneg %p84
        %p283 = pneg %p108
        %p284 = pneg %p105
        %p285 = pneg %p129
        %p286 = pneg %p126
        %p287 = pneg %p150
        %p288 = pneg %p147
        %p289 = pneg %p176
        %p290 = pneg %p173
        %s291 = sand.u32 %s163, 1
        %s292 = scalar_lea.sflag [#allocation4], %s291
        %s293 = sand.u32 %s163, 1
        %s294 = smul.addr %s293, 8
        %s295 = scalar_lea.vmem [#allocation8], %s294
        %v297 = vld [vmem:[%s259] sm:$0xff]
        %v298 = vpack.c.bf16 %v297, %v297
        %v299 = vunpack.c.l.bf16 %v298
        %v300 = vsub.f32 %v297, %v299
        %v301 = vpack.c.bf16 %v300, %v300
        %v302 = vld [vmem:[#allocation5] sm:$0xf]
        %v303 = vld [vmem:[#allocation5 + $0x4] sm:$0xf]
        %v304 = vld [vmem:[#allocation5 + $0x8] sm:$0xf]
        %v305 = vld [vmem:[#allocation5 + $0xc] sm:$0xf]
        %s306 = scalar_lea.vmem [#allocation5], 16
        %v307 = vld [vmem:[%s306] sm:$0xf]
        %v308 = vld [vmem:[%s306 + $0x4] sm:$0xf]
        %v309 = vld [vmem:[%s306 + $0x8] sm:$0xf]
        %v310 = vld [vmem:[%s306 + $0xc] sm:$0xf]
        %v315 = vunpack.c.l.b16 %v307
        %v316 = vunpack.c.l.b16 %v308
        %v317 = vunpack.c.l.b16 %v309
        %v318 = vunpack.c.l.b16 %v310
        %v319 = vpack.c.b16 %v316, %v315
        %v320 = vpack.c.b16 %v318, %v317
        %vm323 = vcmask 261120
        %v325 = vsel %vm323, %v298, 0
        %327 = vmatprep.subr.bf16.mxu0 0
        %328 = vmatpush1.bf16.msra.mxu0 %v319
        %329 = vmatprep.subr.bf16.mxu0 0
        %330 = vmatpush1.bf16.msra.mxu0 %v320
        %331 = vmatprep.subr.bf16.mxu0 0
        %332 = vmatpush1.bf16.msra.mxu0 0
        %333 = vmatprep.subr.bf16.mxu0 0
        %334 = vmatpush1.bf16.msra.mxu0 0
        %335 = vmatprep.subr.bf16.mxu0 0
        %336 = vmatpush1.bf16.msra.mxu0 0
        %337 = vmatprep.subr.bf16.mxu0 0
        %338 = vmatpush1.bf16.msra.mxu0 0
        %339 = vmatprep.subr.bf16.mxu0 0
        %340 = vmatpush1.bf16.msra.mxu0 0
        %341 = vmatprep.subr.bf16.mxu0 0
        %342 = vmatpush1.bf16.msra.mxu0 0
        %343 = vmatprep.subr.bf16.mxu0 0
        %344 = vmatpush1.bf16.msra.mxu0 0
        %345 = vmatprep.subr.bf16.mxu0 0
        %346 = vmatpush1.bf16.msra.mxu0 0
        %347 = vmatprep.subr.bf16.mxu0 0
        %348 = vmatpush1.bf16.msra.mxu0 0
        %349 = vmatprep.subr.bf16.mxu0 0
        %350 = vmatpush1.bf16.msra.mxu0 0
        %351 = vmatprep.subr.bf16.mxu0 0
        %352 = vmatpush1.bf16.msra.mxu0 0
        %353 = vmatprep.subr.bf16.mxu0 0
        %354 = vmatpush1.bf16.msra.mxu0 0
        %355 = vmatprep.subr.bf16.mxu0 0
        %356 = vmatpush1.bf16.msra.mxu0 0
        %357 = vmatprep.subr.bf16.mxu0 0
        %358 = vmatpush1.bf16.msra.mxu0 0
        %359 = vmatprep.mubr.bf16.mxu0 0
        %360 = vmatmul.mubr.bf16.gmra.mrb[0].mxu0 %v325
        %v361 = vpop.f32.mrb[0].mxu0
        %v362 = vadd.f32 0.0, %v361
        %v363 = vpop.f32.mrb[0].mxu0
        %v364 = vpop.f32.mrb[0].mxu0
        %v365 = vpop.f32.mrb[0].mxu0
        %366 = vdwg.mxu0
        %v371 = vunpack.c.l.b16 %v302
        %v372 = vunpack.c.l.b16 %v303
        %v373 = vunpack.c.l.b16 %v304
        %v374 = vunpack.c.l.b16 %v305
        %v375 = vpack.c.b16 %v372, %v371
        %v376 = vpack.c.b16 %v374, %v373
        %379 = vmatprep.subr.bf16.mxu0 0
        %380 = vmatpush1.bf16.msra.mxu0 %v375
        %381 = vmatprep.subr.bf16.mxu0 0
        %382 = vmatpush1.bf16.msra.mxu0 %v376
        %383 = vmatprep.subr.bf16.mxu0 0
        %384 = vmatpush1.bf16.msra.mxu0 0
        %385 = vmatprep.subr.bf16.mxu0 0
        %386 = vmatpush1.bf16.msra.mxu0 0
        %387 = vmatprep.subr.bf16.mxu0 0
        %388 = vmatpush1.bf16.msra.mxu0 0
        %389 = vmatprep.subr.bf16.mxu0 0
        %390 = vmatpush1.bf16.msra.mxu0 0
        %391 = vmatprep.subr.bf16.mxu0 0
        %392 = vmatpush1.bf16.msra.mxu0 0
        %393 = vmatprep.subr.bf16.mxu0 0
        %394 = vmatpush1.bf16.msra.mxu0 0
        %395 = vmatprep.subr.bf16.mxu0 0
        %396 = vmatpush1.bf16.msra.mxu0 0
        %397 = vmatprep.subr.bf16.mxu0 0
        %398 = vmatpush1.bf16.msra.mxu0 0
        %399 = vmatprep.subr.bf16.mxu0 0
        %400 = vmatpush1.bf16.msra.mxu0 0
        %401 = vmatprep.subr.bf16.mxu0 0
        %402 = vmatpush1.bf16.msra.mxu0 0
        %403 = vmatprep.subr.bf16.mxu0 0
        %404 = vmatpush1.bf16.msra.mxu0 0
        %405 = vmatprep.subr.bf16.mxu0 0
        %406 = vmatpush1.bf16.msra.mxu0 0
        %407 = vmatprep.subr.bf16.mxu0 0
        %408 = vmatpush1.bf16.msra.mxu0 0
        %409 = vmatprep.subr.bf16.mxu0 0
        %410 = vmatpush1.bf16.msra.mxu0 0
        %411 = vmatprep.mubr.bf16.mxu0 0
        %412 = vmatmul.mubr.bf16.gmra.mrb[0].mxu0 %v325
        %v413 = vpop.f32.mrb[0].mxu0
        %v414 = vadd.f32 %v362, %v413
        %v415 = vpop.f32.mrb[0].mxu0
        %v416 = vpop.f32.mrb[0].mxu0
        %v417 = vpop.f32.mrb[0].mxu0
        %418 = vdwg.mxu0
        %v420 = vsel %vm323, %v301, 0
        %422 = vmatprep.subr.bf16.mxu0 0
        %423 = vmatpush1.bf16.msra.mxu0 %v375
        %424 = vmatprep.subr.bf16.mxu0 0
        %425 = vmatpush1.bf16.msra.mxu0 %v376
        %426 = vmatprep.subr.bf16.mxu0 0
        %427 = vmatpush1.bf16.msra.mxu0 0
        %428 = vmatprep.subr.bf16.mxu0 0
        %429 = vmatpush1.bf16.msra.mxu0 0
        %430 = vmatprep.subr.bf16.mxu0 0
        %431 = vmatpush1.bf16.msra.mxu0 0
        %432 = vmatprep.subr.bf16.mxu0 0
        %433 = vmatpush1.bf16.msra.mxu0 0
        %434 = vmatprep.subr.bf16.mxu0 0
        %435 = vmatpush1.bf16.msra.mxu0 0
        %436 = vmatprep.subr.bf16.mxu0 0
        %437 = vmatpush1.bf16.msra.mxu0 0
        %438 = vmatprep.subr.bf16.mxu0 0
        %439 = vmatpush1.bf16.msra.mxu0 0
        %440 = vmatprep.subr.bf16.mxu0 0
        %441 = vmatpush1.bf16.msra.mxu0 0
        %442 = vmatprep.subr.bf16.mxu0 0
        %443 = vmatpush1.bf16.msra.mxu0 0
        %444 = vmatprep.subr.bf16.mxu0 0
        %445 = vmatpush1.bf16.msra.mxu0 0
        %446 = vmatprep.subr.bf16.mxu0 0
        %447 = vmatpush1.bf16.msra.mxu0 0
        %448 = vmatprep.subr.bf16.mxu0 0
        %449 = vmatpush1.bf16.msra.mxu0 0
        %450 = vmatprep.subr.bf16.mxu0 0
        %451 = vmatpush1.bf16.msra.mxu0 0
        %452 = vmatprep.subr.bf16.mxu0 0
        %453 = vmatpush1.bf16.msra.mxu0 0
        %454 = vmatprep.mubr.bf16.mxu0 0
        %455 = vmatmul.mubr.bf16.gmra.mrb[0].mxu0 %v420
        %v456 = vpop.f32.mrb[0].mxu0
        %v457 = vadd.f32 0.0, %v456
        %v458 = vpop.f32.mrb[0].mxu0
        %v459 = vpop.f32.mrb[0].mxu0
        %v460 = vpop.f32.mrb[0].mxu0
        %461 = vdwg.mxu0
        %v462 = vadd.f32 %v414, %v457
        %v463 = vpack.c.bf16 %v462, %v462
        %v464 = vunpack.c.l.bf16 %v463
        %v465 = vsub.f32 %v462, %v464
        %v466 = vpack.c.bf16 %v465, %v465
        %v467 = vld [vmem:[#allocation7] sm:$0xf]
        %s468 = scalar_lea.vmem [#allocation7], 4
        %v469 = vld [vmem:[%s468] sm:$0xf]
        %v470 = vld [vmem:[%s3] sm:$0xf]
        %s471 = scalar_lea.vmem %s3, 4
        %v472 = vld [vmem:[%s471] sm:$0xf]
        %vm473 = vcmask 64512
        %v475 = vsel %vm473, %v467, 0
        %vm477 = vcmask 1043456
        %v479 = vsel %vm477, %v466, 0
        %481 = vmatprep.subr.bf16.mxu0 0
        %482 = vmatpush1.bf16.msra.mxu0 %v479
        %483 = vmatprep.subr.bf16.mxu0 0
        %484 = vmatpush1.bf16.msra.mxu0 0
        %485 = vmatprep.subr.bf16.mxu0 0
        %486 = vmatpush1.bf16.msra.mxu0 0
        %487 = vmatprep.subr.bf16.mxu0 0
        %488 = vmatpush1.bf16.msra.mxu0 0
        %489 = vmatprep.subr.bf16.mxu0 0
        %490 = vmatpush1.bf16.msra.mxu0 0
        %491 = vmatprep.subr.bf16.mxu0 0
        %492 = vmatpush1.bf16.msra.mxu0 0
        %493 = vmatprep.subr.bf16.mxu0 0
        %494 = vmatpush1.bf16.msra.mxu0 0
        %495 = vmatprep.subr.bf16.mxu0 0
        %496 = vmatpush1.bf16.msra.mxu0 0
        %497 = vmatprep.subr.bf16.mxu0 0
        %498 = vmatpush1.bf16.msra.mxu0 0
        %499 = vmatprep.subr.bf16.mxu0 0
        %500 = vmatpush1.bf16.msra.mxu0 0
        %501 = vmatprep.subr.bf16.mxu0 0
        %502 = vmatpush1.bf16.msra.mxu0 0
        %503 = vmatprep.subr.bf16.mxu0 0
        %504 = vmatpush1.bf16.msra.mxu0 0
        %505 = vmatprep.subr.bf16.mxu0 0
        %506 = vmatpush1.bf16.msra.mxu0 0
        %507 = vmatprep.subr.bf16.mxu0 0
        %508 = vmatpush1.bf16.msra.mxu0 0
        %509 = vmatprep.subr.bf16.mxu0 0
        %510 = vmatpush1.bf16.msra.mxu0 0
        %511 = vmatprep.subr.bf16.mxu0 0
        %512 = vmatpush1.bf16.msra.mxu0 0
        %513 = vmatprep.mubr.bf16.mxu0 0
        %514 = vmatmul.mubr.bf16.gmra.mrb[0].mxu0 %v475
        %v515 = vpop.f32.mrb[0].mxu0
        %v516 = vadd.f32 0.0, %v515
        %v517 = vpop.f32.mrb[0].mxu0
        %v518 = vpop.f32.mrb[0].mxu0
        %v519 = vpop.f32.mrb[0].mxu0
        %520 = vdwg.mxu0
        %v522 = vsel %vm477, %v463, 0
        %524 = vmatprep.subr.bf16.mxu0 0
        %525 = vmatpush1.bf16.msra.mxu0 %v522
        %526 = vmatprep.subr.bf16.mxu0 0
        %527 = vmatpush1.bf16.msra.mxu0 0
        %528 = vmatprep.subr.bf16.mxu0 0
        %529 = vmatpush1.bf16.msra.mxu0 0
        %530 = vmatprep.subr.bf16.mxu0 0
        %531 = vmatpush1.bf16.msra.mxu0 0
        %532 = vmatprep.subr.bf16.mxu0 0
        %533 = vmatpush1.bf16.msra.mxu0 0
        %534 = vmatprep.subr.bf16.mxu0 0
        %535 = vmatpush1.bf16.msra.mxu0 0
        %536 = vmatprep.subr.bf16.mxu0 0
        %537 = vmatpush1.bf16.msra.mxu0 0
        %538 = vmatprep.subr.bf16.mxu0 0
        %539 = vmatpush1.bf16.msra.mxu0 0
        %540 = vmatprep.subr.bf16.mxu0 0
        %541 = vmatpush1.bf16.msra.mxu0 0
        %542 = vmatprep.subr.bf16.mxu0 0
        %543 = vmatpush1.bf16.msra.mxu0 0
        %544 = vmatprep.subr.bf16.mxu0 0
        %545 = vmatpush1.bf16.msra.mxu0 0
        %546 = vmatprep.subr.bf16.mxu0 0
        %547 = vmatpush1.bf16.msra.mxu0 0
        %548 = vmatprep.subr.bf16.mxu0 0
        %549 = vmatpush1.bf16.msra.mxu0 0
        %550 = vmatprep.subr.bf16.mxu0 0
        %551 = vmatpush1.bf16.msra.mxu0 0
        %552 = vmatprep.subr.bf16.mxu0 0
        %553 = vmatpush1.bf16.msra.mxu0 0
        %554 = vmatprep.subr.bf16.mxu0 0
        %555 = vmatpush1.bf16.msra.mxu0 0
        %556 = vmatprep.mubr.bf16.mxu0 0
        %557 = vmatmul.mubr.bf16.gmra.mrb[0].mxu0 %v475
        %v558 = vpop.f32.mrb[0].mxu0
        %v559 = vadd.f32 %v516, %v558
        %v560 = vpop.f32.mrb[0].mxu0
        %v561 = vpop.f32.mrb[0].mxu0
        %v562 = vpop.f32.mrb[0].mxu0
        %563 = vdwg.mxu0
        %v565 = vsel %vm473, %v469, 0
        %567 = vmatprep.subr.bf16.mxu0 0
        %568 = vmatpush1.bf16.msra.mxu0 %v522
        %569 = vmatprep.subr.bf16.mxu0 0
        %570 = vmatpush1.bf16.msra.mxu0 0
        %571 = vmatprep.subr.bf16.mxu0 0
        %572 = vmatpush1.bf16.msra.mxu0 0
        %573 = vmatprep.subr.bf16.mxu0 0
        %574 = vmatpush1.bf16.msra.mxu0 0
        %575 = vmatprep.subr.bf16.mxu0 0
        %576 = vmatpush1.bf16.msra.mxu0 0
        %577 = vmatprep.subr.bf16.mxu0 0
        %578 = vmatpush1.bf16.msra.mxu0 0
        %579 = vmatprep.subr.bf16.mxu0 0
        %580 = vmatpush1.bf16.msra.mxu0 0
        %581 = vmatprep.subr.bf16.mxu0 0
        %582 = vmatpush1.bf16.msra.mxu0 0
        %583 = vmatprep.subr.bf16.mxu0 0
        %584 = vmatpush1.bf16.msra.mxu0 0
        %585 = vmatprep.subr.bf16.mxu0 0
        %586 = vmatpush1.bf16.msra.mxu0 0
        %587 = vmatprep.subr.bf16.mxu0 0
        %588 = vmatpush1.bf16.msra.mxu0 0
        %589 = vmatprep.subr.bf16.mxu0 0
        %590 = vmatpush1.bf16.msra.mxu0 0
        %591 = vmatprep.subr.bf16.mxu0 0
        %592 = vmatpush1.bf16.msra.mxu0 0
        %593 = vmatprep.subr.bf16.mxu0 0
        %594 = vmatpush1.bf16.msra.mxu0 0
        %595 = vmatprep.subr.bf16.mxu0 0
        %596 = vmatpush1.bf16.msra.mxu0 0
        %597 = vmatprep.subr.bf16.mxu0 0
        %598 = vmatpush1.bf16.msra.mxu0 0
        %599 = vmatprep.mubr.bf16.mxu0 0
        %600 = vmatmul.mubr.bf16.gmra.mrb[0].mxu0 %v565
        %v601 = vpop.f32.mrb[0].mxu0
        %v602 = vadd.f32 0.0, %v601
        %v603 = vpop.f32.mrb[0].mxu0
        %v604 = vpop.f32.mrb[0].mxu0
        %v605 = vpop.f32.mrb[0].mxu0
        %606 = vdwg.mxu0
        %v607 = vadd.f32 %v559, %v602
        %609 = vrot.lane.b32.xlu0 %v463, 96
        %v610 = vpop.permute.xlu0 %609
        %v612 = vsel %vm473, %v470, 0
        %v615 = vsel %vm477, %v610, 0
        %617 = vmatprep.subr.bf16.mxu0 0
        %618 = vmatpush1.bf16.msra.mxu0 %v615
        %619 = vmatprep.subr.bf16.mxu0 0
        %620 = vmatpush1.bf16.msra.mxu0 0
        %621 = vmatprep.subr.bf16.mxu0 0
        %622 = vmatpush1.bf16.msra.mxu0 0
        %623 = vmatprep.subr.bf16.mxu0 0
        %624 = vmatpush1.bf16.msra.mxu0 0
        %625 = vmatprep.subr.bf16.mxu0 0
        %626 = vmatpush1.bf16.msra.mxu0 0
        %627 = vmatprep.subr.bf16.mxu0 0
        %628 = vmatpush1.bf16.msra.mxu0 0
        %629 = vmatprep.subr.bf16.mxu0 0
        %630 = vmatpush1.bf16.msra.mxu0 0
        %631 = vmatprep.subr.bf16.mxu0 0
        %632 = vmatpush1.bf16.msra.mxu0 0
        %633 = vmatprep.subr.bf16.mxu0 0
        %634 = vmatpush1.bf16.msra.mxu0 0
        %635 = vmatprep.subr.bf16.mxu0 0
        %636 = vmatpush1.bf16.msra.mxu0 0
        %637 = vmatprep.subr.bf16.mxu0 0
        %638 = vmatpush1.bf16.msra.mxu0 0
        %639 = vmatprep.subr.bf16.mxu0 0
        %640 = vmatpush1.bf16.msra.mxu0 0
        %641 = vmatprep.subr.bf16.mxu0 0
        %642 = vmatpush1.bf16.msra.mxu0 0
        %643 = vmatprep.subr.bf16.mxu0 0
        %644 = vmatpush1.bf16.msra.mxu0 0
        %645 = vmatprep.subr.bf16.mxu0 0
        %646 = vmatpush1.bf16.msra.mxu0 0
        %647 = vmatprep.subr.bf16.mxu0 0
        %648 = vmatpush1.bf16.msra.mxu0 0
        %649 = vmatprep.mubr.bf16.mxu0 0
        %650 = vmatmul.mubr.bf16.gmra.mrb[0].mxu0 %v612
        %v651 = vpop.f32.mrb[0].mxu0
        %v652 = vadd.f32 0.0, %v651
        %v653 = vpop.f32.mrb[0].mxu0
        %v654 = vpop.f32.mrb[0].mxu0
        %v655 = vpop.f32.mrb[0].mxu0
        %656 = vdwg.mxu0
        %v657 = vsub.f32 %v607, %v652
        %659 = vrot.lane.b32.xlu0 %v466, 96
        %v660 = vpop.permute.xlu0 %659
        %v662 = vsel %vm477, %v660, 0
        %664 = vmatprep.subr.bf16.mxu0 0
        %665 = vmatpush1.bf16.msra.mxu0 %v662
        %666 = vmatprep.subr.bf16.mxu0 0
        %667 = vmatpush1.bf16.msra.mxu0 0
        %668 = vmatprep.subr.bf16.mxu0 0
        %669 = vmatpush1.bf16.msra.mxu0 0
        %670 = vmatprep.subr.bf16.mxu0 0
        %671 = vmatpush1.bf16.msra.mxu0 0
        %672 = vmatprep.subr.bf16.mxu0 0
        %673 = vmatpush1.bf16.msra.mxu0 0
        %674 = vmatprep.subr.bf16.mxu0 0
        %675 = vmatpush1.bf16.msra.mxu0 0
        %676 = vmatprep.subr.bf16.mxu0 0
        %677 = vmatpush1.bf16.msra.mxu0 0
        %678 = vmatprep.subr.bf16.mxu0 0
        %679 = vmatpush1.bf16.msra.mxu0 0
        %680 = vmatprep.subr.bf16.mxu0 0
        %681 = vmatpush1.bf16.msra.mxu0 0
        %682 = vmatprep.subr.bf16.mxu0 0
        %683 = vmatpush1.bf16.msra.mxu0 0
        %684 = vmatprep.subr.bf16.mxu0 0
        %685 = vmatpush1.bf16.msra.mxu0 0
        %686 = vmatprep.subr.bf16.mxu0 0
        %687 = vmatpush1.bf16.msra.mxu0 0
        %688 = vmatprep.subr.bf16.mxu0 0
        %689 = vmatpush1.bf16.msra.mxu0 0
        %690 = vmatprep.subr.bf16.mxu0 0
        %691 = vmatpush1.bf16.msra.mxu0 0
        %692 = vmatprep.subr.bf16.mxu0 0
        %693 = vmatpush1.bf16.msra.mxu0 0
        %694 = vmatprep.subr.bf16.mxu0 0
        %695 = vmatpush1.bf16.msra.mxu0 0
        %696 = vmatprep.mubr.bf16.mxu0 0
        %697 = vmatmul.mubr.bf16.gmra.mrb[0].mxu0 %v612
        %v698 = vpop.f32.mrb[0].mxu0
        %v699 = vadd.f32 0.0, %v698
        %v700 = vpop.f32.mrb[0].mxu0
        %v701 = vpop.f32.mrb[0].mxu0
        %v702 = vpop.f32.mrb[0].mxu0
        %703 = vdwg.mxu0
        %v704 = vsub.f32 %v657, %v699
        %v706 = vsel %vm473, %v472, 0
        %708 = vmatprep.subr.bf16.mxu0 0
        %709 = vmatpush1.bf16.msra.mxu0 %v615
        %710 = vmatprep.subr.bf16.mxu0 0
        %711 = vmatpush1.bf16.msra.mxu0 0
        %712 = vmatprep.subr.bf16.mxu0 0
        %713 = vmatpush1.bf16.msra.mxu0 0
        %714 = vmatprep.subr.bf16.mxu0 0
        %715 = vmatpush1.bf16.msra.mxu0 0
        %716 = vmatprep.subr.bf16.mxu0 0
        %717 = vmatpush1.bf16.msra.mxu0 0
        %718 = vmatprep.subr.bf16.mxu0 0
        %719 = vmatpush1.bf16.msra.mxu0 0
        %720 = vmatprep.subr.bf16.mxu0 0
        %721 = vmatpush1.bf16.msra.mxu0 0
        %722 = vmatprep.subr.bf16.mxu0 0
        %723 = vmatpush1.bf16.msra.mxu0 0
        %724 = vmatprep.subr.bf16.mxu0 0
        %725 = vmatpush1.bf16.msra.mxu0 0
        %726 = vmatprep.subr.bf16.mxu0 0
        %727 = vmatpush1.bf16.msra.mxu0 0
        %728 = vmatprep.subr.bf16.mxu0 0
        %729 = vmatpush1.bf16.msra.mxu0 0
        %730 = vmatprep.subr.bf16.mxu0 0
        %731 = vmatpush1.bf16.msra.mxu0 0
        %732 = vmatprep.subr.bf16.mxu0 0
        %733 = vmatpush1.bf16.msra.mxu0 0
        %734 = vmatprep.subr.bf16.mxu0 0
        %735 = vmatpush1.bf16.msra.mxu0 0
        %736 = vmatprep.subr.bf16.mxu0 0
        %737 = vmatpush1.bf16.msra.mxu0 0
        %738 = vmatprep.subr.bf16.mxu0 0
        %739 = vmatpush1.bf16.msra.mxu0 0
        %740 = vmatprep.mubr.bf16.mxu0 0
        %741 = vmatmul.mubr.bf16.gmra.mrb[0].mxu0 %v706
        %v742 = vpop.f32.mrb[0].mxu0
        %v743 = vadd.f32 0.0, %v742
        %v744 = vpop.f32.mrb[0].mxu0
        %v745 = vpop.f32.mrb[0].mxu0
        %v746 = vpop.f32.mrb[0].mxu0
        %747 = vdwg.mxu0
        %v748 = vsub.f32 %v704, %v743
        %v749 = vadd.f32 %v297, %v748
        %v750 = vsel %vm323, %v749, 0.0
        %751 = vadd.xlane.f32.xlu0 %v750
        %v752 = vpop.xlane.xlu0 %751
        %v753 = vrcp.pop 32.0
        %v754 = vmul.f32 %v752, %v753
        %v755 = vsub.f32 %v749, %v754
        %v756 = vmul.f32 %v755, %v755
        %v757 = vsel %vm323, %v756, 0.0
        %758 = vadd.xlane.f32.xlu0 %v757
        %v759 = vpop.xlane.xlu0 %758
        %v760 = vmul.f32 %v759, %v753
        %v761 = vadd.f32 %v760, 1e-12
        %v762 = vrsqrt.pop %v761
        %v763 = vmul.f32 %v755, %v762
        %v764 = vld [vmem:[%s4] sm:$0x1]
        %v766 = vlaneseq
        %v767 = vshrl.u32 %v766, 7
        %v768 = vsub.s32 0, %v767
        %v769 = vrot.slane %v764, %v768
        %v771 = vmul.f32 %v763, %v769
        %v772 = vld [vmem:[%s5] sm:$0x1]
        %v774 = vlaneseq
        %v775 = vshrl.u32 %v774, 7
        %v776 = vsub.s32 0, %v775
        %v777 = vrot.slane %v772, %v776
        %v779 = vadd.f32 %v771, %v777
        %780 = vst.msk [vmem:[%s295] sm:$0xff] %vm323, %v779
        %s781 = sand.u32 %s163, 1
        %s782 = scalar_lea.sflag [#allocation4], %s781
        %s783 = sand.u32 %s163, 1
        %s784 = smul.addr %s783, 8
        %s785 = scalar_lea.vmem [#allocation8], %s784
        // Predicated region
        $region57: #{tpu_custom_call.1} parent=43 // pred_check
          %p786 = pneg %p173
        $region58: #{tpu_custom_call.1} parent=43 // pred_check_branch
          %788 = sbr.rel (%p786) target = $region60
        $region59: #{tpu_custom_call.1} parent=43 // pred_region
          %s790 = ssub.s32 128, 128
          %791 = vsyncadd %s782, %s790
          %s792 = smul.addr %s24, 128
          %s793 = scalar_lea.hbm %s6, %s792
          %s795 = sshll.u32 %s785, 4
          %s796 = int_to_ptr.vmem [resolvable:$true] %s795
          %798 = dma.vmem_to_hbm [thread:$0]  %s796, 128, %s793, %s782
        $region60: #{tpu_custom_call.1} parent=43 // pred_fallthru
          _
      $region44: #{tpu_custom_call.1} parent=5 // pred_fallthru
        _
      %p799 = scmp.le.s32.totalorder 2, %s19
      // Predicated region
      $region61: #{tpu_custom_call.1} parent=5 // pred_check
        %p800 = pneg %p799
      $region62: #{tpu_custom_call.1} parent=5 // pred_check_branch
        %802 = sbr.rel (%p800) target = $region64
      $region63: #{tpu_custom_call.1} parent=5 // pred_region
        %s803 = ssub.s32 %s19, 2
        // Predicated region
        $region65: #{tpu_custom_call.1} parent=63 // pred_check
          %p804 = pneg %p179
        $region66: #{tpu_custom_call.1} parent=63 // pred_check_branch
          %806 = sbr.rel (%p804) target = $region68
        $region67: #{tpu_custom_call.1} parent=63 // pred_region
          %s807 = sand.u32 %s164, 1
          %s808 = scalar_lea.sflag [#allocation4], %s807
          %s809 = sand.u32 %s164, 1
          %s810 = smul.addr %s809, 8
          %s811 = scalar_lea.vmem [#allocation8], %s810
          %812 = dma.done %s808, 128
        $region68: #{tpu_custom_call.1} parent=63 // pred_fallthru
          _
      $region64: #{tpu_custom_call.1} parent=5 // pred_fallthru
        _
    $region6: #{tpu_custom_call.1} parent=1 // loop_footer
      %s23 = sadd.s32 1, %s19
    $region7: #{tpu_custom_call.1} parent=1 // loop_footer_branch
      %18 = sbr.rel target = $region3
    $region8: #{tpu_custom_call.1} parent=1 // loop_exit
      _
    %813 = vsyncpa [#allocation3], 1
    %s814 = scalar_lea.sflag [#allocation3], 1
    %815 = vsyncpa %s814, 1
    %816 = vsyncpa [#allocation6], 1
    %817 = vsyncpa [#allocation4], 1
    %s818 = scalar_lea.sflag [#allocation4], 1
    %819 = vsyncpa %s818, 1

</llo_original>
